<compile_context>
chip_gen: v7x
topology: tpu7x:2x2x1
jax: 0.10.0
libtpu: 0.0.40
codegen_flags: <defaults>
</compile_context>

<pallas_src>
import functools
import math

import jax
import jax.numpy as jnp
import numpy as np
from jax.experimental import pallas as pl
from jax.experimental.pallas import tpu as pltpu

EMB = 80                 # emb_size
HEADS = 4                # num_heads
HEAD_DIM = EMB // HEADS  # 20
PROJ_PAD = 128           # lane-dense output width (zero-padded from EMB)


def mha_kernel(x_ref, wqkv_ref, bqkv_ref, wproj_ref, bproj_ref, mask_ref,
               o_ref, out_scratch, *, seq_len, batch_tile, matmul_dtype):
    n = seq_len
    dt = matmul_dtype
    inv_scale = 1.0 / (EMB ** 0.5)

    x = x_ref[...]                                            # (m_tile, E), dt

    # --- fused QKV projection, all rows of the tile in one MXU call (f32 acc) ---
    qkv = jnp.dot(x, wqkv_ref[...],
                  preferred_element_type=jnp.float32) + bqkv_ref[...]  # (m_tile, 3E) f32
    q = qkv[:, 0 * EMB:1 * EMB]
    k = qkv[:, 1 * EMB:2 * EMB]
    v = qkv[:, 2 * EMB:3 * EMB]

    head_mask = mask_ref[...]                                 # (H*n, E) f32, resident const

    for b in range(batch_tile):                               # small static unroll
        rs = slice(b * n, (b + 1) * n)                        # sublane-aligned
        qb = q[rs]                                            # (n, E) f32
        kb = k[rs].astype(dt)
        vb = v[rs].astype(dt)

        # All heads' energies in ONE full-width MXU pass: replicate q along sublanes,
        # keep only head-h columns in row block h, contract over full E.
        q_rep = jnp.concatenate([qb] * HEADS, axis=0) * head_mask     # (H*n, E) f32
        energy = jax.lax.dot_general(
            q_rep.astype(dt), kb,
            (((1,), (1,)), ((), ())),
            preferred_element_type=jnp.float32)                       # (H*n, n) f32

        # Row-wise softmax == per-head softmax; 1/sqrt(E) folded into the normalizer;
        # reciprocal on the EUP slot.  All stats stay f32 (v5e guard rail).
        m = jnp.max(energy, axis=-1, keepdims=True)
        e = jnp.exp(energy - m)
        denom = jnp.sum(e, axis=-1, keepdims=True)
        att = e * (inv_scale * pl.reciprocal(denom, approx=True))     # (H*n, n) f32

        # All heads' att @ v in ONE MXU pass; keep each block's own-head columns,
        # sum the H sublane blocks -> heads concatenated along lanes.
        o_stack = jnp.dot(att.astype(dt), vb,
                          preferred_element_type=jnp.float32) * head_mask  # (H*n, E)
        out_b = o_stack[0:n]
        for h in range(1, HEADS):
            out_b = out_b + o_stack[h * n:(h + 1) * n]                # (n, E) f32
        out_scratch[rs, :] = out_b

    # --- batched output projection (M = m_tile) with lane-dense 128-wide store ---
    out = out_scratch[...]                                            # (m_tile, E) f32
    o_ref[...] = (jnp.dot(out.astype(dt), wproj_ref[...],
                          preferred_element_type=jnp.float32)
                  + bproj_ref[...]).astype(o_ref.dtype)               # (m_tile, 128)


def _vmem_budget_bytes(m_tile, n, op_bytes, out_bytes):
    tiles = 2 * m_tile * EMB * op_bytes + 2 * m_tile * PROJ_PAD * out_bytes
    weights = 2 * ((EMB * 3 * EMB + EMB * PROJ_PAD) * op_bytes
                   + (3 * EMB + PROJ_PAD) * 4
                   + HEADS * n * EMB * 4)
    scratch = m_tile * EMB * 4
    interm = (m_tile * 3 * EMB + 2 * HEADS * n * n + 2 * HEADS * n * EMB
              + m_tile * EMB) * 4
    total = tiles + weights + scratch + interm
    # 2x headroom, floor 16 MiB, cap 48 MiB (fits v7x's 64 MiB physical VMEM).
    return int(min(max(2 * total, 16 << 20), 48 << 20))


def multi_head_attention(x, Wqkv, bqkv, Wproj, bproj, *,
                         batch_tile=None, matmul_dtype=jnp.bfloat16):
    """x: (B, N, E); PyTorch-convention params: Wqkv (3E,E), bqkv (3E,),
    Wproj (E,E), bproj (E,).  matmul_dtype controls MXU operand dtype only."""
    B, N, E = x.shape
    assert E == EMB and N % 8 == 0

    if batch_tile is None:
        # Aim for ~512 rows per projection matmul, but ALWAYS keep >= 2 parallel
        # grid steps when B >= 2 (v7x megacore) and a tiny in-kernel unroll.
        target = max(1, 512 // N)
        batch_tile = max(1, min(target, max(1, B // 2)))
        while B % batch_tile:
            batch_tile -= 1
    assert B % batch_tile == 0
    m_tile = batch_tile * N
    grid = B // batch_tile

    # --- plain-JAX parameter prep (done once, outside the kernel) ---
    # Permute qkv output features from interleaved (h, d, qkv) to contiguous [q|k|v].
    perm = np.array(
        [(h * HEAD_DIM + d) * 3 + qi
         for qi in range(3) for h in range(HEADS) for d in range(HEAD_DIM)],
        dtype=np.int32)
    wqkv_t = jnp.asarray(Wqkv)[perm].T                                  # (E, 3E)
    bqkv_k = jnp.asarray(bqkv)[perm].reshape(1, 3 * E).astype(jnp.float32)
    # Zero-pad projection to 128 output lanes -> unmasked (lane-dense) output stores.
    wproj_pad = jnp.zeros((E, PROJ_PAD), jnp.float32).at[:, :E].set(
        jnp.asarray(Wproj, jnp.float32).T)
    bproj_pad = jnp.zeros((1, PROJ_PAD), jnp.float32).at[:, :E].set(
        jnp.asarray(bproj, jnp.float32))

    x2 = x.reshape(B * N, E)
    if matmul_dtype != jnp.float32:
        # Pre-cast MXU operands in the wrapper: halves x DMA bytes and resident
        # weight VMEM, removes per-step VPU casts.  Biases stay f32.
        x2 = x2.astype(matmul_dtype)
        wqkv_t = wqkv_t.astype(matmul_dtype)
        wproj_pad = wproj_pad.astype(matmul_dtype)

    # Constant block-diagonal head mask (f32, resident VMEM input).
    head_mask = jnp.asarray(
        np.kron(np.eye(HEADS, dtype=np.float32),
                np.ones((N, HEAD_DIM), dtype=np.float32)))              # (H*N, E)

    kernel = functools.partial(mha_kernel, seq_len=N, batch_tile=batch_tile,
                               matmul_dtype=matmul_dtype)

    vmem_bytes = _vmem_budget_bytes(
        m_tile, N, jnp.dtype(matmul_dtype).itemsize, jnp.dtype(x.dtype).itemsize)

    out2 = pl.pallas_call(
        kernel,
        out_shape=jax.ShapeDtypeStruct((B * N, PROJ_PAD), x.dtype),
        grid_spec=pltpu.PrefetchScalarGridSpec(
            num_scalar_prefetch=0,
            grid=(grid,),
            in_specs=[
                pl.BlockSpec((m_tile, E), lambda i: (i, 0)),
                pl.BlockSpec((E, 3 * E), lambda i: (0, 0)),      # resident weights
                pl.BlockSpec((1, 3 * E), lambda i: (0, 0)),
                pl.BlockSpec((E, PROJ_PAD), lambda i: (0, 0)),
                pl.BlockSpec((1, PROJ_PAD), lambda i: (0, 0)),
                pl.BlockSpec((HEADS * N, E), lambda i: (0, 0)),  # head mask
            ],
            out_specs=pl.BlockSpec((m_tile, PROJ_PAD), lambda i: (i, 0)),
            scratch_shapes=[pltpu.VMEM((m_tile, EMB), jnp.float32)],
        ),
        compiler_params=pltpu.CompilerParams(
            dimension_semantics=("parallel",),
            vmem_limit_bytes=vmem_bytes),
    )(x2, wqkv_t, bqkv_k, wproj_pad, bproj_pad, head_mask)

    return out2[:, :E].reshape(B, N, E)


# ---------------------------------------------------------------------------
# Pure-JAX reference mimicking the PyTorch module exactly (for verification).
# ---------------------------------------------------------------------------
def reference(x, Wqkv, bqkv, Wproj, bproj):
    B, N, E = x.shape
    qkv = x @ Wqkv.T + bqkv                                         # (B, N, 3E)
    qkv = qkv.reshape(B, N, HEADS, HEAD_DIM, 3)
    qkv = jnp.transpose(qkv, (4, 0, 2, 1, 3))                       # (3, B, H, N, D)
    q, k, v = qkv[0], qkv[1], qkv[2]
    energy = jnp.einsum('bhqd,bhkd->bhqk', q, k)
    att = jax.nn.softmax(energy, axis=-1) / (E ** 0.5)
    out = jnp.einsum('bhal,bhlv->bhav', att, v)
    out = jnp.transpose(out, (0, 2, 1, 3)).reshape(B, N, E)
    return out @ Wproj.T + bproj


if __name__ == "__main__":
    B, N, E = 2, 8, EMB

    key = jax.random.PRNGKey(0)
    kx, k1, k2, k3, k4 = jax.random.split(key, 5)

    x = jax.random.normal(kx, (B, N, E), dtype=jnp.float32)

    bound = 1.0 / math.sqrt(E)
    Wqkv = jax.random.uniform(k1, (3 * E, E), jnp.float32, -bound, bound)
    bqkv = jax.random.uniform(k2, (3 * E,), jnp.float32, -bound, bound)
    Wproj = jax.random.uniform(k3, (E, E), jnp.float32, -bound, bound)
    bproj = jax.random.uniform(k4, (E,), jnp.float32, -bound, bound)

    ref = reference(x, Wqkv, bqkv, Wproj, bproj)

    # Default: bf16 MXU operands, f32 accumulation/softmax, 2 parallel grid steps.
    out = jax.block_until_ready(multi_head_attention(x, Wqkv, bqkv, Wproj, bproj))
    np.testing.assert_allclose(np.asarray(out), np.asarray(ref), rtol=5e-2, atol=5e-2)

    # f32 MXU-operand path (approx reciprocal in the softmax -> ~1e-4 rel error).
    out2 = jax.block_until_ready(
        multi_head_attention(x, Wqkv, bqkv, Wproj, bproj,
                             matmul_dtype=jnp.float32))
    np.testing.assert_allclose(np.asarray(out2), np.asarray(ref), rtol=5e-3, atol=5e-3)

    # batch_tile=2 exercises the multi-element unroll + VMEM scratch path (grid=1).
    out3 = jax.block_until_ready(
        multi_head_attention(x, Wqkv, bqkv, Wproj, bproj, batch_tile=2))
    np.testing.assert_allclose(np.asarray(out3), np.asarray(ref), rtol=5e-2, atol=5e-2)

    print("KERNEL_OK")
</pallas_src>

<mosaic_0001>
module attributes {stable_mosaic.version = 11 : i64} {
  func.func @mha_kernel(%arg0: i32, %arg1: memref<8x80xbf16, #tpu.memory_space<vmem>>, %arg2: memref<80x240xbf16, #tpu.memory_space<vmem>>, %arg3: memref<1x240xf32, #tpu.memory_space<vmem>>, %arg4: memref<80x128xbf16, #tpu.memory_space<vmem>>, %arg5: memref<1x128xf32, #tpu.memory_space<vmem>>, %arg6: memref<32x80xf32, #tpu.memory_space<vmem>>, %arg7: memref<8x128xf32, #tpu.memory_space<vmem>>, %arg8: memref<8x80xf32, #tpu.memory_space<vmem>>) attributes {dimension_semantics = [#tpu.dimension_semantics<parallel>], iteration_bounds = array<i64: 2>, scalar_prefetch = 0 : i64, scratch_operands = 1 : i64, tpu.core_type = #tpu.core_type<tc>, window_params = [{transform_indices = @transform_0, window_bounds = array<i64: 8, 80>}, {pipeline_mode = #tpu.pipeline_mode<synchronous>, transform_indices = @transform_1, window_bounds = array<i64: 80, 240>}, {pipeline_mode = #tpu.pipeline_mode<synchronous>, transform_indices = @transform_2, window_bounds = array<i64: 1, 240>}, {pipeline_mode = #tpu.pipeline_mode<synchronous>, transform_indices = @transform_3, window_bounds = array<i64: 80, 128>}, {pipeline_mode = #tpu.pipeline_mode<synchronous>, transform_indices = @transform_4, window_bounds = array<i64: 1, 128>}, {pipeline_mode = #tpu.pipeline_mode<synchronous>, transform_indices = @transform_5, window_bounds = array<i64: 32, 80>}, {transform_indices = @transform_6, window_bounds = array<i64: 8, 128>}]} {
    %c0 = arith.constant 0 : index
    %c0_0 = arith.constant 0 : index
    %0 = vector.load %arg1[%c0, %c0_0] : memref<8x80xbf16, #tpu.memory_space<vmem>>, vector<8x80xbf16>
    %c0_1 = arith.constant 0 : index
    %c0_2 = arith.constant 0 : index
    %1 = vector.load %arg2[%c0_1, %c0_2] : memref<80x240xbf16, #tpu.memory_space<vmem>>, vector<80x240xbf16>
    %cst = arith.constant dense<0.000000e+00> : vector<8x240xf32>
    %2 = tpu.matmul %0, %1, %cst {dimension_numbers = #tpu.dot_dimension_numbers<[1], [0], [0], [1], [0, 0, 1, 1], [], []>} : vector<8x80xbf16>, vector<80x240xbf16>, vector<8x240xf32> -> vector<8x240xf32>
    %c0_3 = arith.constant 0 : index
    %c0_4 = arith.constant 0 : index
    %3 = vector.load %arg3[%c0_3, %c0_4] : memref<1x240xf32, #tpu.memory_space<vmem>>, vector<1x240xf32>
    %4 = vector.broadcast %3 : vector<1x240xf32> to vector<8x240xf32>
    %5 = arith.addf %2, %4 : vector<8x240xf32>
    %6 = vector.extract_strided_slice %5 {offsets = [0, 0], sizes = [8, 80], strides = [1, 1]} : vector<8x240xf32> to vector<8x80xf32>
    %7 = vector.extract_strided_slice %5 {offsets = [0, 80], sizes = [8, 80], strides = [1, 1]} : vector<8x240xf32> to vector<8x80xf32>
    %8 = vector.extract_strided_slice %5 {offsets = [0, 160], sizes = [8, 80], strides = [1, 1]} : vector<8x240xf32> to vector<8x80xf32>
    %c0_5 = arith.constant 0 : index
    %c0_6 = arith.constant 0 : index
    %9 = vector.load %arg6[%c0_5, %c0_6] : memref<32x80xf32, #tpu.memory_space<vmem>>, vector<32x80xf32>
    %10 = arith.truncf %7 : vector<8x80xf32> to vector<8x80xbf16>
    %11 = arith.truncf %8 : vector<8x80xf32> to vector<8x80xbf16>
    %12 = tpu.concatenate %6, %6, %6, %6 in 0 : vector<8x80xf32>, vector<8x80xf32>, vector<8x80xf32>, vector<8x80xf32> -> vector<32x80xf32>
    %13 = arith.mulf %12, %9 : vector<32x80xf32>
    %14 = arith.truncf %13 : vector<32x80xf32> to vector<32x80xbf16>
    %cst_7 = arith.constant dense<0.000000e+00> : vector<32x8xf32>
    %15 = tpu.matmul %14, %10, %cst_7 {dimension_numbers = #tpu.dot_dimension_numbers<[1], [1], [0], [0], [0, 0, 1, 0], [], []>} : vector<32x80xbf16>, vector<8x80xbf16>, vector<32x8xf32> -> vector<32x8xf32>
    %cst_8 = arith.constant dense<0xFF800000> : vector<32xf32>
    %16 = vector.multi_reduction <maximumf>, %15, %cst_8 [1] : vector<32x8xf32> to vector<32xf32>
    %17 = vector.shape_cast %16 : vector<32xf32> to vector<32x1xf32>
    %18 = vector.broadcast %17 : vector<32x1xf32> to vector<32x8xf32>
    %19 = arith.subf %15, %18 : vector<32x8xf32>
    %20 = math.exp %19 : vector<32x8xf32>
    %cst_9 = arith.constant dense<0.000000e+00> : vector<32xf32>
    %21 = vector.multi_reduction <add>, %20, %cst_9 [1] : vector<32x8xf32> to vector<32xf32>
    %22 = vector.shape_cast %21 : vector<32xf32> to vector<32x1xf32>
    %23 = tpu.reciprocal %22 {approx = true} : vector<32x1xf32> -> vector<32x1xf32>
    %cst_10 = arith.constant 0.111803398 : f32
    %24 = vector.broadcast %cst_10 : f32 to vector<32x1xf32>
    %25 = arith.mulf %24, %23 : vector<32x1xf32>
    %26 = vector.broadcast %25 : vector<32x1xf32> to vector<32x8xf32>
    %27 = arith.mulf %20, %26 : vector<32x8xf32>
    %28 = arith.truncf %27 : vector<32x8xf32> to vector<32x8xbf16>
    %cst_11 = arith.constant dense<0.000000e+00> : vector<32x80xf32>
    %29 = tpu.matmul %28, %11, %cst_11 {dimension_numbers = #tpu.dot_dimension_numbers<[1], [0], [0], [1], [0, 0, 1, 1], [], []>} : vector<32x8xbf16>, vector<8x80xbf16>, vector<32x80xf32> -> vector<32x80xf32>
    %30 = arith.mulf %29, %9 : vector<32x80xf32>
    %31 = vector.extract_strided_slice %30 {offsets = [0, 0], sizes = [8, 80], strides = [1, 1]} : vector<32x80xf32> to vector<8x80xf32>
    %32 = vector.extract_strided_slice %30 {offsets = [8, 0], sizes = [8, 80], strides = [1, 1]} : vector<32x80xf32> to vector<8x80xf32>
    %33 = arith.addf %31, %32 : vector<8x80xf32>
    %34 = vector.extract_strided_slice %30 {offsets = [16, 0], sizes = [8, 80], strides = [1, 1]} : vector<32x80xf32> to vector<8x80xf32>
    %35 = arith.addf %33, %34 : vector<8x80xf32>
    %36 = vector.extract_strided_slice %30 {offsets = [24, 0], sizes = [8, 80], strides = [1, 1]} : vector<32x80xf32> to vector<8x80xf32>
    %37 = arith.addf %35, %36 : vector<8x80xf32>
    %c0_12 = arith.constant 0 : index
    %c0_13 = arith.constant 0 : index
    %38 = vector.load %arg8[%c0_12, %c0_13] : memref<8x80xf32, #tpu.memory_space<vmem>>, vector<8x80xf32>
    tpu.vector_store %arg8[%c0_12, %c0_13], %37 {strides = array<i32>} : memref<8x80xf32, #tpu.memory_space<vmem>>, vector<8x80xf32>,
    %c0_14 = arith.constant 0 : index
    %c0_15 = arith.constant 0 : index
    %39 = vector.load %arg8[%c0_14, %c0_15] : memref<8x80xf32, #tpu.memory_space<vmem>>, vector<8x80xf32>
    %40 = arith.truncf %39 : vector<8x80xf32> to vector<8x80xbf16>
    %c0_16 = arith.constant 0 : index
    %c0_17 = arith.constant 0 : index
    %41 = vector.load %arg4[%c0_16, %c0_17] : memref<80x128xbf16, #tpu.memory_space<vmem>>, vector<80x128xbf16>
    %cst_18 = arith.constant dense<0.000000e+00> : vector<8x128xf32>
    %42 = tpu.matmul %40, %41, %cst_18 {dimension_numbers = #tpu.dot_dimension_numbers<[1], [0], [0], [1], [0, 0, 1, 1], [], []>} : vector<8x80xbf16>, vector<80x128xbf16>, vector<8x128xf32> -> vector<8x128xf32>
    %c0_19 = arith.constant 0 : index
    %c0_20 = arith.constant 0 : index
    %43 = vector.load %arg5[%c0_19, %c0_20] : memref<1x128xf32, #tpu.memory_space<vmem>>, vector<1x128xf32>
    %44 = vector.broadcast %43 : vector<1x128xf32> to vector<8x128xf32>
    %45 = arith.addf %42, %44 : vector<8x128xf32>
    %c0_21 = arith.constant 0 : index
    %c0_22 = arith.constant 0 : index
    %46 = vector.load %arg7[%c0_21, %c0_22] : memref<8x128xf32, #tpu.memory_space<vmem>>, vector<8x128xf32>
    tpu.vector_store %arg7[%c0_21, %c0_22], %45 {strides = array<i32>} : memref<8x128xf32, #tpu.memory_space<vmem>>, vector<8x128xf32>,
    return
  }
  func.func @transform_0(%arg0: i32) -> (i32, i32) {
    %c0_i32 = arith.constant 0 : i32
    %c0_i32_0 = arith.constant 0 : i32
    return %arg0, %c0_i32 : i32, i32
  }
  func.func @transform_1(%arg0: i32) -> (i32, i32) {
    %c0_i32 = arith.constant 0 : i32
    %c0_i32_0 = arith.constant 0 : i32
    %c0_i32_1 = arith.constant 0 : i32
    return %c0_i32, %c0_i32_0 : i32, i32
  }
  func.func @transform_2(%arg0: i32) -> (i32, i32) {
    %c0_i32 = arith.constant 0 : i32
    %c0_i32_0 = arith.constant 0 : i32
    %c0_i32_1 = arith.constant 0 : i32
    return %c0_i32, %c0_i32_0 : i32, i32
  }
  func.func @transform_3(%arg0: i32) -> (i32, i32) {
    %c0_i32 = arith.constant 0 : i32
    %c0_i32_0 = arith.constant 0 : i32
    %c0_i32_1 = arith.constant 0 : i32
    return %c0_i32, %c0_i32_0 : i32, i32
  }
  func.func @transform_4(%arg0: i32) -> (i32, i32) {
    %c0_i32 = arith.constant 0 : i32
    %c0_i32_0 = arith.constant 0 : i32
    %c0_i32_1 = arith.constant 0 : i32
    return %c0_i32, %c0_i32_0 : i32, i32
  }
  func.func @transform_5(%arg0: i32) -> (i32, i32) {
    %c0_i32 = arith.constant 0 : i32
    %c0_i32_0 = arith.constant 0 : i32
    %c0_i32_1 = arith.constant 0 : i32
    return %c0_i32, %c0_i32_0 : i32, i32
  }
  func.func @transform_6(%arg0: i32) -> (i32, i32) {
    %c0_i32 = arith.constant 0 : i32
    %c0_i32_0 = arith.constant 0 : i32
    return %arg0, %c0_i32 : i32, i32
  }
}

</mosaic_0001>

<llo_original>
// kernel: tpu_custom_call.1
$region0: #{tpu_custom_call.1}
  #allocation0 [shape = 'u32[]', space=smem, size = 0x4, offset = 0x4, fixed_abs, tag = 'smem constant byte address 0x4 - core index']
  #allocation1 [shape = 'u32[144,128]{1,0:T(1,128)}', space=vmem, size = 0x12000, scoped, tag = 'internal scratch']
  #allocation2 [shape = 'f32[8,80]{1,0:T(8,128)}', space=vmem, size = 0x1000, scoped, tag = 'scratch operand']
  %s0 = inlined_call_operand.hbm [shape: bf16[16,80], index: 0, kind: input, shape index: {}]
  %s1 = inlined_call_operand.hbm [shape: bf16[80,240], index: 1, kind: input, shape index: {}]
  %s2 = inlined_call_operand.vmem [shape: f32[1,240], index: 2, kind: input, shape index: {}]
  %s3 = inlined_call_operand.hbm [shape: bf16[80,128], index: 3, kind: input, shape index: {}]
  %s4 = inlined_call_operand.vmem [shape: f32[1,128], index: 4, kind: input, shape index: {}]
  %s5 = inlined_call_operand.hbm [shape: f32[32,80], index: 5, kind: input, shape index: {}]
  %s6 = inlined_call_operand.hbm [shape: f32[16,128], index: 6, kind: output, shape index: {}]
  %s7 = sld [smem:[#allocation0]]
  $region73: #{tpu_custom_call.1} parent=0
    _
  %s9 = ssub.s32 1, %s7
  %s10 = scalar_select 0, %s9, %s7
  $region1: #{tpu_custom_call.1} parent=0
    #allocation3 [shape = 'u8[4096]{0}', space=vmem, size = 0x1000, scoped, tag = 'input window, operand 0']
    #allocation4 [shape = 's32[2]{0}', space=sflag, size = 0x8, scoped, tag = 'scoped memory for tpu_custom_call.1']
    #allocation5 [shape = 's32[2]{0}', space=sflag, size = 0x8, scoped, tag = 'scoped memory for tpu_custom_call.1']
    #allocation6 [shape = 'u8[40960]{0}', space=vmem, size = 0xa000, scoped, tag = 'input window, operand 1, single buffered']
    #allocation7 [shape = 's32[1]{0}', space=sflag, size = 0x4, scoped, tag = 'scoped memory for tpu_custom_call.1']
    #allocation8 [shape = 'u8[20480]{0}', space=vmem, size = 0x5000, scoped, tag = 'input window, operand 3, single buffered']
    #allocation9 [shape = 'u8[16384]{0}', space=vmem, size = 0x4000, scoped, tag = 'input window, operand 5, single buffered']
    #allocation10 [shape = 's32[1]{0}', space=sflag, size = 0x4, scoped, tag = 'scoped memory for tpu_custom_call.1']
    #allocation11 [shape = 'u8[8192]{0}', space=vmem, size = 0x2000, scoped, tag = 'output window, operand 0']
    %11 = vsyncpa [#allocation4], 0
    %s12 = scalar_lea.sflag [#allocation4], 1
    %13 = vsyncpa %s12, 0
    %14 = vsyncpa [#allocation7], 0
    %15 = vsyncpa [#allocation10], 0
    %16 = vsyncpa [#allocation5], 0
    %s17 = scalar_lea.sflag [#allocation5], 1
    %18 = vsyncpa %s17, 0
    loop: start=0, step=1, limit=4
    $region2: #{tpu_custom_call.1} parent=1 // loop_pre_header
      _
    $region3: #{tpu_custom_call.1} parent=1 // loop_header
      %s20 = sphi 0, %s24
      %p21 = scmp.ge.s32.totalorder %s20, 4
      %s30 = sphi 0, %s32
      %s33 = sphi 0, %s30
      %s34 = sphi 0, %s33
      %s50 = sphi 0, %s34
      %s54 = sphi 0, %s54
      %s56 = sphi 0, %s54
      %s57 = sphi 0, %s56
      %s71 = sphi 0, %s57
      %s75 = sphi 0, %s75
      %s77 = sphi 0, %s75
      %s78 = sphi 0, %s77
      %s92 = sphi 0, %s78
      %s96 = sphi 0, %s96
      %s98 = sphi 0, %s96
      %s99 = sphi 0, %s98
      %s113 = sphi 0, %s99
      %s117 = sphi 0, %s117
      %s119 = sphi 0, %s117
      %s120 = sphi 0, %s119
      %s134 = sphi 0, %s120
      %s138 = sphi 0, %s138
      %s140 = sphi 0, %s138
      %s141 = sphi 0, %s140
      %s155 = sphi 0, %s141
      %s161 = sphi 0, %s163
      %s164 = sphi 0, %s161
      %s165 = sphi 0, %s164
      %s181 = sphi 0, %s165
    $region4: #{tpu_custom_call.1} parent=1 // loop_header_branch
      %23 = sbr.rel (%p21) target = $region8
    $region5: #{tpu_custom_call.1} parent=1 // loop_body
      %s25 = ssub.s32 %s20, 1
      %s26 = ssub.s32 %s20, 2
      %s27 = sadd.s32 %s20, 1
      %s28 = ssub.s32 %s20, %s27
      %p29 = scmp.eq.s32.totalorder %s28, 0
      %s31 = sadd.s32 %s30, 1
      %s32 = scalar_select %p29, %s30, %s31
      %p35 = pneg %p29
      %p36 = scmp.eq.s32.totalorder %s20, 1
      %p37 = por %p35, %p36
      %p38 = scmp.ne.s32.totalorder %s30, %s33
      %p39 = scmp.eq.s32.totalorder %s20, 0
      %p40 = por %p38, %p39
      %p41 = scmp.ne.s32.totalorder %s30, %s33
      %p42 = scmp.eq.s32.totalorder %s25, 1
      %p43 = por %p41, %p42
      %p44 = scmp.ne.s32.totalorder %s33, %s34
      %p45 = scmp.eq.s32.totalorder %s25, 0
      %p46 = por %p44, %p45
      %p47 = scmp.ne.s32.totalorder %s33, %s34
      %p48 = scmp.eq.s32.totalorder %s26, 1
      %p49 = por %p47, %p48
      %p51 = scmp.ne.s32.totalorder %s34, %s50
      %p52 = scmp.eq.s32.totalorder %s26, 0
      %p53 = por %p51, %p52
      %s55 = sadd.s32 %s54, 1
      %p58 = scmp.eq.s32.totalorder %s20, 1
      %p59 = scmp.ne.s32.totalorder %s54, %s56
      %p60 = scmp.eq.s32.totalorder %s20, 0
      %p61 = por %p59, %p60
      %p62 = scmp.ne.s32.totalorder %s54, %s56
      %p63 = scmp.eq.s32.totalorder %s25, 1
      %p64 = por %p62, %p63
      %p65 = scmp.ne.s32.totalorder %s56, %s57
      %p66 = scmp.eq.s32.totalorder %s25, 0
      %p67 = por %p65, %p66
      %p68 = scmp.ne.s32.totalorder %s56, %s57
      %p69 = scmp.eq.s32.totalorder %s26, 1
      %p70 = por %p68, %p69
      %p72 = scmp.ne.s32.totalorder %s57, %s71
      %p73 = scmp.eq.s32.totalorder %s26, 0
      %p74 = por %p72, %p73
      %s76 = sadd.s32 %s75, 1
      %p79 = scmp.eq.s32.totalorder %s20, 1
      %p80 = scmp.ne.s32.totalorder %s75, %s77
      %p81 = scmp.eq.s32.totalorder %s20, 0
      %p82 = por %p80, %p81
      %p83 = scmp.ne.s32.totalorder %s75, %s77
      %p84 = scmp.eq.s32.totalorder %s25, 1
      %p85 = por %p83, %p84
      %p86 = scmp.ne.s32.totalorder %s77, %s78
      %p87 = scmp.eq.s32.totalorder %s25, 0
      %p88 = por %p86, %p87
      %p89 = scmp.ne.s32.totalorder %s77, %s78
      %p90 = scmp.eq.s32.totalorder %s26, 1
      %p91 = por %p89, %p90
      %p93 = scmp.ne.s32.totalorder %s78, %s92
      %p94 = scmp.eq.s32.totalorder %s26, 0
      %p95 = por %p93, %p94
      %s97 = sadd.s32 %s96, 1
      %p100 = scmp.eq.s32.totalorder %s20, 1
      %p101 = scmp.ne.s32.totalorder %s96, %s98
      %p102 = scmp.eq.s32.totalorder %s20, 0
      %p103 = por %p101, %p102
      %p104 = scmp.ne.s32.totalorder %s96, %s98
      %p105 = scmp.eq.s32.totalorder %s25, 1
      %p106 = por %p104, %p105
      %p107 = scmp.ne.s32.totalorder %s98, %s99
      %p108 = scmp.eq.s32.totalorder %s25, 0
      %p109 = por %p107, %p108
      %p110 = scmp.ne.s32.totalorder %s98, %s99
      %p111 = scmp.eq.s32.totalorder %s26, 1
      %p112 = por %p110, %p111
      %p114 = scmp.ne.s32.totalorder %s99, %s113
      %p115 = scmp.eq.s32.totalorder %s26, 0
      %p116 = por %p114, %p115
      %s118 = sadd.s32 %s117, 1
      %p121 = scmp.eq.s32.totalorder %s20, 1
      %p122 = scmp.ne.s32.totalorder %s117, %s119
      %p123 = scmp.eq.s32.totalorder %s20, 0
      %p124 = por %p122, %p123
      %p125 = scmp.ne.s32.totalorder %s117, %s119
      %p126 = scmp.eq.s32.totalorder %s25, 1
      %p127 = por %p125, %p126
      %p128 = scmp.ne.s32.totalorder %s119, %s120
      %p129 = scmp.eq.s32.totalorder %s25, 0
      %p130 = por %p128, %p129
      %p131 = scmp.ne.s32.totalorder %s119, %s120
      %p132 = scmp.eq.s32.totalorder %s26, 1
      %p133 = por %p131, %p132
      %p135 = scmp.ne.s32.totalorder %s120, %s134
      %p136 = scmp.eq.s32.totalorder %s26, 0
      %p137 = por %p135, %p136
      %s139 = sadd.s32 %s138, 1
      %p142 = scmp.eq.s32.totalorder %s20, 1
      %p143 = scmp.ne.s32.totalorder %s138, %s140
      %p144 = scmp.eq.s32.totalorder %s20, 0
      %p145 = por %p143, %p144
      %p146 = scmp.ne.s32.totalorder %s138, %s140
      %p147 = scmp.eq.s32.totalorder %s25, 1
      %p148 = por %p146, %p147
      %p149 = scmp.ne.s32.totalorder %s140, %s141
      %p150 = scmp.eq.s32.totalorder %s25, 0
      %p151 = por %p149, %p150
      %p152 = scmp.ne.s32.totalorder %s140, %s141
      %p153 = scmp.eq.s32.totalorder %s26, 1
      %p154 = por %p152, %p153
      %p156 = scmp.ne.s32.totalorder %s141, %s155
      %p157 = scmp.eq.s32.totalorder %s26, 0
      %p158 = por %p156, %p157
      %s159 = ssub.s32 %s20, %s27
      %p160 = scmp.eq.s32.totalorder %s159, 0
      %s162 = sadd.s32 %s161, 1
      %s163 = scalar_select %p160, %s161, %s162
      %p166 = pneg %p160
      %p167 = scmp.eq.s32.totalorder %s20, 1
      %p168 = por %p166, %p167
      %p169 = scmp.ne.s32.totalorder %s161, %s164
      %p170 = scmp.eq.s32.totalorder %s20, 0
      %p171 = por %p169, %p170
      %p172 = scmp.ne.s32.totalorder %s161, %s164
      %p173 = scmp.eq.s32.totalorder %s25, 1
      %p174 = por %p172, %p173
      %p175 = scmp.ne.s32.totalorder %s164, %s165
      %p176 = scmp.eq.s32.totalorder %s25, 0
      %p177 = por %p175, %p176
      %p178 = scmp.ne.s32.totalorder %s164, %s165
      %p179 = scmp.eq.s32.totalorder %s26, 1
      %p180 = por %p178, %p179
      %p182 = scmp.ne.s32.totalorder %s165, %s181
      %p183 = scmp.eq.s32.totalorder %s26, 0
      %p184 = por %p182, %p183
      %p185 = scmp.le.s32.totalorder 1, %s20
      %p186 = scmp.lt.s32.totalorder %s20, 3
      %p187 = pnand %p185, %p186
      %p188 = pneg %p187
      // Predicated region
      $region9: #{tpu_custom_call.1} parent=5 // pred_check
        _
      $region10: #{tpu_custom_call.1} parent=5 // pred_check_branch
        %190 = sbr.rel (%p187) target = $region12
      $region11: #{tpu_custom_call.1} parent=5 // pred_region
        %s191 = ssub.s32 %s20, 1
        // Predicated region
        $region13: #{tpu_custom_call.1} parent=11 // pred_check
          %p192 = pneg %p67
        $region14: #{tpu_custom_call.1} parent=11 // pred_check_branch
          %194 = sbr.rel (%p192) target = $region16
        $region15: #{tpu_custom_call.1} parent=11 // pred_region
          %s196 = ssub.s32 1280, 1280
          %197 = vsyncadd [#allocation7], %s196
          %s198 = sshll.u32 [#allocation6], 4
          %s199 = int_to_ptr.vmem [resolvable:$true] %s198
          %204 = dma.hbm_to_vmem [thread:$0]  %s1, 1280, %s199, [#allocation7], 128, 128, 8
        $region16: #{tpu_custom_call.1} parent=11 // pred_fallthru
          _
        // Predicated region
        $region17: #{tpu_custom_call.1} parent=11 // pred_check
          %p205 = pneg %p88
        $region18: #{tpu_custom_call.1} parent=11 // pred_check_branch
          %207 = sbr.rel (%p205) target = $region20
        $region19: #{tpu_custom_call.1} parent=11 // pred_region
          _
        $region20: #{tpu_custom_call.1} parent=11 // pred_fallthru
          _
        // Predicated region
        $region21: #{tpu_custom_call.1} parent=11 // pred_check
          %p208 = pneg %p109
        $region22: #{tpu_custom_call.1} parent=11 // pred_check_branch
          %210 = sbr.rel (%p208) target = $region24
        $region23: #{tpu_custom_call.1} parent=11 // pred_region
          %s212 = ssub.s32 640, 640
          %213 = vsyncadd [#allocation7], %s212
          %s214 = sshll.u32 [#allocation8], 4
          %s215 = int_to_ptr.vmem [resolvable:$true] %s214
          %220 = dma.hbm_to_vmem [thread:$0]  %s3, 640, %s215, [#allocation7], 64, 64, 4
        $region24: #{tpu_custom_call.1} parent=11 // pred_fallthru
          _
        // Predicated region
        $region25: #{tpu_custom_call.1} parent=11 // pred_check
          %p221 = pneg %p130
        $region26: #{tpu_custom_call.1} parent=11 // pred_check_branch
          %223 = sbr.rel (%p221) target = $region28
        $region27: #{tpu_custom_call.1} parent=11 // pred_region
          _
        $region28: #{tpu_custom_call.1} parent=11 // pred_fallthru
          _
        // Predicated region
        $region29: #{tpu_custom_call.1} parent=11 // pred_check
          %p224 = pneg %p151
        $region30: #{tpu_custom_call.1} parent=11 // pred_check_branch
          %226 = sbr.rel (%p224) target = $region32
        $region31: #{tpu_custom_call.1} parent=11 // pred_region
          %s228 = ssub.s32 512, 512
          %229 = vsyncadd [#allocation10], %s228
          %s230 = sshll.u32 [#allocation9], 4
          %s231 = int_to_ptr.vmem [resolvable:$true] %s230
          %236 = dma.hbm_to_vmem [thread:$0]  %s5, 512, %s231, [#allocation10], 128, 128, 8
        $region32: #{tpu_custom_call.1} parent=11 // pred_fallthru
          _
      $region12: #{tpu_custom_call.1} parent=5 // pred_fallthru
        _
      %p237 = scmp.lt.s32.totalorder %s20, 2
      // Predicated region
      $region33: #{tpu_custom_call.1} parent=5 // pred_check
        %p238 = pneg %p237
      $region34: #{tpu_custom_call.1} parent=5 // pred_check_branch
        %240 = sbr.rel (%p238) target = $region36
      $region35: #{tpu_custom_call.1} parent=5 // pred_region
        // Predicated region
        $region37: #{tpu_custom_call.1} parent=35 // pred_check
          %p241 = pneg %p40
        $region38: #{tpu_custom_call.1} parent=35 // pred_check_branch
          %243 = sbr.rel (%p241) target = $region40
        $region39: #{tpu_custom_call.1} parent=35 // pred_region
          %s244 = sand.u32 %s30, 1
          %s245 = scalar_lea.sflag [#allocation4], %s244
          %s246 = sand.u32 %s30, 1
          %s247 = smul.addr %s246, 4
          %s248 = scalar_lea.vmem [#allocation3], %s247
          %s250 = ssub.s32 64, 64
          %251 = vsyncadd %s245, %s250
          %s252 = smul.addr %s20, 64
          %s253 = scalar_lea.hbm %s0, %s252
          %s255 = sshll.u32 %s248, 4
          %s256 = int_to_ptr.vmem [resolvable:$true] %s255
          %258 = dma.hbm_to_vmem [thread:$0]  %s253, 64, %s256, %s245
        $region40: #{tpu_custom_call.1} parent=35 // pred_fallthru
          _
      $region36: #{tpu_custom_call.1} parent=5 // pred_fallthru
        _
      %p259 = scmp.le.s32.totalorder 1, %s20
      %p260 = scmp.lt.s32.totalorder %s20, 3
      %p261 = pnand %p259, %p260
      %p262 = pneg %p261
      // Predicated region
      $region41: #{tpu_custom_call.1} parent=5 // pred_check
        _
      $region42: #{tpu_custom_call.1} parent=5 // pred_check_branch
        %264 = sbr.rel (%p261) target = $region44
      $region43: #{tpu_custom_call.1} parent=5 // pred_region
        %s265 = ssub.s32 %s20, 1
        %s266 = sand.u32 %s33, 1
        %s267 = scalar_lea.sflag [#allocation4], %s266
        %s268 = sand.u32 %s33, 1
        %s269 = smul.addr %s268, 4
        %s270 = scalar_lea.vmem [#allocation3], %s269
        // Predicated region
        $region45: #{tpu_custom_call.1} parent=43 // pred_check
          %p271 = pneg %p46
        $region46: #{tpu_custom_call.1} parent=43 // pred_check_branch
          %273 = sbr.rel (%p271) target = $region48
        $region47: #{tpu_custom_call.1} parent=43 // pred_region
          %274 = dma.done %s267, 64
        $region48: #{tpu_custom_call.1} parent=43 // pred_fallthru
          _
        // Predicated region
        $region49: #{tpu_custom_call.1} parent=43 // pred_check
          %p275 = pneg %p67
        $region50: #{tpu_custom_call.1} parent=43 // pred_check_branch
          %277 = sbr.rel (%p275) target = $region52
        $region51: #{tpu_custom_call.1} parent=43 // pred_region
          %278 = dma.done [#allocation7], 1280
        $region52: #{tpu_custom_call.1} parent=43 // pred_fallthru
          _
        // Predicated region
        $region53: #{tpu_custom_call.1} parent=43 // pred_check
          %p279 = pneg %p109
        $region54: #{tpu_custom_call.1} parent=43 // pred_check_branch
          %281 = sbr.rel (%p279) target = $region56
        $region55: #{tpu_custom_call.1} parent=43 // pred_region
          %282 = dma.done [#allocation7], 640
        $region56: #{tpu_custom_call.1} parent=43 // pred_fallthru
          _
        // Predicated region
        $region57: #{tpu_custom_call.1} parent=43 // pred_check
          %p283 = pneg %p151
        $region58: #{tpu_custom_call.1} parent=43 // pred_check_branch
          %285 = sbr.rel (%p283) target = $region60
        $region59: #{tpu_custom_call.1} parent=43 // pred_region
          %286 = dma.done [#allocation10], 512
        $region60: #{tpu_custom_call.1} parent=43 // pred_fallthru
          _
        %s287 = sand.u32 %s33, 1
        %s288 = scalar_lea.sflag [#allocation4], %s287
        %s289 = sand.u32 %s33, 1
        %s290 = smul.addr %s289, 4
        %s291 = scalar_lea.vmem [#allocation3], %s290
        %p292 = pneg %p46
        %p293 = pneg %p43
        %p294 = pneg %p67
        %p295 = pneg %p64
        %p296 = pneg %p88
        %p297 = pneg %p85
        %p298 = pneg %p109
        %p299 = pneg %p106
        %p300 = pneg %p130
        %p301 = pneg %p127
        %p302 = pneg %p151
        %p303 = pneg %p148
        %p304 = pneg %p177
        %p305 = pneg %p174
        %s306 = sand.u32 %s164, 1
        %s307 = scalar_lea.sflag [#allocation5], %s306
        %s308 = sand.u32 %s164, 1
        %s309 = smul.addr %s308, 8
        %s310 = scalar_lea.vmem [#allocation11], %s309
        %v312 = vld [vmem:[%s270] sm:$0xf]
        %v313 = vld [vmem:[#allocation6] sm:$0xff]
        %v314 = vld [vmem:[#allocation6 + $0x8] sm:$0xff]
        %v315 = vld [vmem:[#allocation6 + $0x10] sm:$0xff]
        %v316 = vld [vmem:[#allocation6 + $0x18] sm:$0xff]
        %v317 = vld [vmem:[#allocation6 + $0x20] sm:$0xff]
        %v318 = vld [vmem:[#allocation6 + $0x28] sm:$0xff]
        %v319 = vld [vmem:[#allocation6 + $0x30] sm:$0xff]
        %v320 = vld [vmem:[#allocation6 + $0x38] sm:$0xff]
        %v321 = vld [vmem:[#allocation6 + $0x40] sm:$0xff]
        %v322 = vld [vmem:[#allocation6 + $0x48] sm:$0xff]
        %v323 = vld [vmem:[%s2] sm:$0x3]
        %v325 = vlaneseq
        %v326 = vshrl.u32 %v325, 7
        %v327 = vsub.s32 0, %v326
        %v328 = vrot.slane %v323, %v327
        %v329 = vlaneseq
        %v330 = vshrl.u32 %v329, 7
        %v331 = vsub.s32 1, %v330
        %v332 = vrot.slane %v323, %v331
        %v345 = vunpack.c.l.b16 %v313
        %v346 = vunpack.c.h.b16 %v313
        %v347 = vunpack.c.l.b16 %v314
        %v348 = vunpack.c.h.b16 %v314
        %v349 = vunpack.c.l.b16 %v315
        %v350 = vunpack.c.h.b16 %v315
        %v351 = vunpack.c.l.b16 %v316
        %v352 = vunpack.c.h.b16 %v316
        %v353 = vunpack.c.l.b16 %v317
        %v354 = vunpack.c.h.b16 %v317
        %v355 = vunpack.c.l.b16 %v318
        %v356 = vunpack.c.h.b16 %v318
        %v357 = vunpack.c.l.b16 %v319
        %v358 = vunpack.c.h.b16 %v319
        %v359 = vunpack.c.l.b16 %v320
        %v360 = vunpack.c.h.b16 %v320
        %v361 = vunpack.c.l.b16 %v321
        %v362 = vunpack.c.h.b16 %v321
        %v363 = vunpack.c.l.b16 %v322
        %v364 = vunpack.c.h.b16 %v322
        %v365 = vpack.c.b16 %v347, %v345
        %v366 = vpack.c.b16 %v348, %v346
        %v367 = vpack.c.b16 %v351, %v349
        %v368 = vpack.c.b16 %v352, %v350
        %v369 = vpack.c.b16 %v355, %v353
        %v370 = vpack.c.b16 %v356, %v354
        %v371 = vpack.c.b16 %v359, %v357
        %v372 = vpack.c.b16 %v360, %v358
        %v373 = vpack.c.b16 %v363, %v361
        %v374 = vpack.c.b16 %v364, %v362
        %vm385 = vcmask 654336
        %v387 = vsel %vm385, %v312, 0
        %389 = vmatprep.subr.bf16.mxu0 %v366
        %390 = vmatpush1.bf16.msra.mxu0 %v365
        %391 = vmatprep.subr.bf16.mxu0 %v368
        %392 = vmatpush1.bf16.msra.mxu0 %v367
        %393 = vmatprep.subr.bf16.mxu0 %v370
        %394 = vmatpush1.bf16.msra.mxu0 %v369
        %395 = vmatprep.subr.bf16.mxu0 %v372
        %396 = vmatpush1.bf16.msra.mxu0 %v371
        %397 = vmatprep.subr.bf16.mxu0 %v374
        %398 = vmatpush1.bf16.msra.mxu0 %v373
        %399 = vmatprep.subr.bf16.mxu0 0
        %400 = vmatpush1.bf16.msra.mxu0 0
        %401 = vmatprep.subr.bf16.mxu0 0
        %402 = vmatpush1.bf16.msra.mxu0 0
        %403 = vmatprep.subr.bf16.mxu0 0
        %404 = vmatpush1.bf16.msra.mxu0 0
        %405 = vmatprep.subr.bf16.mxu0 0
        %406 = vmatpush1.bf16.msra.mxu0 0
        %407 = vmatprep.subr.bf16.mxu0 0
        %408 = vmatpush1.bf16.msra.mxu0 0
        %409 = vmatprep.subr.bf16.mxu0 0
        %410 = vmatpush1.bf16.msra.mxu0 0
        %411 = vmatprep.subr.bf16.mxu0 0
        %412 = vmatpush1.bf16.msra.mxu0 0
        %413 = vmatprep.subr.bf16.mxu0 0
        %414 = vmatpush1.bf16.msra.mxu0 0
        %415 = vmatprep.subr.bf16.mxu0 0
        %416 = vmatpush1.bf16.msra.mxu0 0
        %417 = vmatprep.subr.bf16.mxu0 0
        %418 = vmatpush1.bf16.msra.mxu0 0
        %419 = vmatprep.subr.bf16.mxu0 0
        %420 = vmatpush1.bf16.msra.mxu0 0
        %421 = vmatprep.mubr.bf16.mxu0 0
        %422 = vmatmul.mubr.bf16.gmra.mrb[0].mxu0 %v387
        %v423 = vpop.f32.mrb[0].mxu0
        %v424 = vadd.f32 %v328, %v423
        %v425 = vpop.f32.mrb[0].mxu0
        %v426 = vadd.f32 %v332, %v425
        %v427 = vpop.f32.mrb[0].mxu0
        %v428 = vpop.f32.mrb[0].mxu0
        %429 = vdwg.mxu0
        %v430 = vld [vmem:[#allocation9] sm:$0xff]
        %v431 = vld [vmem:[#allocation9 + $0x8] sm:$0xff]
        %v432 = vld [vmem:[#allocation9 + $0x10] sm:$0xff]
        %v433 = vld [vmem:[#allocation9 + $0x18] sm:$0xff]
        %v434 = vpack.c.bf16 %v424, %v424
        %v435 = vpack.c.bf16 %v426, %v426
        %v436 = vmul.f32 %v424, %v430
        %v437 = vmul.f32 %v424, %v431
        %v438 = vmul.f32 %v424, %v432
        %v439 = vmul.f32 %v424, %v433
        %v440 = vpack.c.bf16 %v437, %v436
        %v441 = vpack.c.bf16 %v439, %v438
        %444 = vrot.lane.b32.xlu0 %v434, 48
        %v445 = vpop.permute.xlu0 %444
        %446 = vrot.lane.b32.xlu0 %v435, 48
        %v447 = vpop.permute.xlu0 %446
        %vm448 = vcmask 392192
        %v449 = vsel %vm448, %v445, %v447
        %v451 = vsel %vm385, %v440, 0
        %v454 = vsel %vm385, %v441, 0
        %v457 = vsel %vm385, %v449, 0
        %459 = vmatprep.subr.bf16.mxu0 0
        %460 = vmatpush1.bf16.xpose.msra.mxu0 %v457
        %461 = vmatprep.subr.bf16.mxu0 0
        %462 = vmatpush1.bf16.xpose.msra.mxu0 0
        %463 = vmatprep.subr.bf16.mxu0 0
        %464 = vmatpush1.bf16.xpose.msra.mxu0 0
        %465 = vmatprep.subr.bf16.mxu0 0
        %466 = vmatpush1.bf16.xpose.msra.mxu0 0
        %467 = vmatprep.subr.bf16.mxu0 0
        %468 = vmatpush1.bf16.xpose.msra.mxu0 0
        %469 = vmatprep.subr.bf16.mxu0 0
        %470 = vmatpush1.bf16.xpose.msra.mxu0 0
        %471 = vmatprep.subr.bf16.mxu0 0
        %472 = vmatpush1.bf16.xpose.msra.mxu0 0
        %473 = vmatprep.subr.bf16.mxu0 0
        %474 = vmatpush1.bf16.xpose.msra.mxu0 0
        %475 = vmatprep.subr.bf16.mxu0 0
        %476 = vmatpush1.bf16.xpose.msra.mxu0 0
        %477 = vmatprep.subr.bf16.mxu0 0
        %478 = vmatpush1.bf16.xpose.msra.mxu0 0
        %479 = vmatprep.subr.bf16.mxu0 0
        %480 = vmatpush1.bf16.xpose.msra.mxu0 0
        %481 = vmatprep.subr.bf16.mxu0 0
        %482 = vmatpush1.bf16.xpose.msra.mxu0 0
        %483 = vmatprep.subr.bf16.mxu0 0
        %484 = vmatpush1.bf16.xpose.msra.mxu0 0
        %485 = vmatprep.subr.bf16.mxu0 0
        %486 = vmatpush1.bf16.xpose.msra.mxu0 0
        %487 = vmatprep.subr.bf16.mxu0 0
        %488 = vmatpush1.bf16.xpose.msra.mxu0 0
        %489 = vmatprep.subr.bf16.mxu0 0
        %490 = vmatpush1.bf16.xpose.msra.mxu0 0
        %491 = vmatprep.mubr.bf16.mxu0 0
        %492 = vmatmul.mubr.bf16.gmra.mrb[0].mxu0 %v451
        %v493 = vpop.f32.mrb[0].mxu0
        %v494 = vadd.f32 0.0, %v493
        %v495 = vpop.f32.mrb[0].mxu0
        %v496 = vpop.f32.mrb[0].mxu0
        %v497 = vadd.f32 0.0, %v496
        %v498 = vpop.f32.mrb[0].mxu0
        %499 = vmatprep.mubr.bf16.mxu0 0
        %500 = vmatmul.mubr.bf16.gmra.mrb[0].mxu0 %v454
        %v501 = vpop.f32.mrb[0].mxu0
        %v502 = vadd.f32 0.0, %v501
        %v503 = vpop.f32.mrb[0].mxu0
        %v504 = vpop.f32.mrb[0].mxu0
        %v505 = vadd.f32 0.0, %v504
        %v506 = vpop.f32.mrb[0].mxu0
        %507 = vdwg.mxu0
        %vm508 = vcmask 64512
        %v509 = vsel %vm508, %v494, -inf
        %510 = vmax.xlane.f32.xlu0 %v509
        %v511 = vpop.xlane.xlu0 %510
        %v512 = vsel %vm508, %v497, -inf
        %513 = vmax.xlane.f32.xlu0 %v512
        %v514 = vpop.xlane.xlu0 %513
        %v515 = vsel %vm508, %v502, -inf
        %516 = vmax.xlane.f32.xlu0 %v515
        %v517 = vpop.xlane.xlu0 %516
        %v518 = vsel %vm508, %v505, -inf
        %519 = vmax.xlane.f32.xlu0 %v518
        %v520 = vpop.xlane.xlu0 %519
        %v521 = vsub.f32 %v494, %v511
        %v522 = vsub.f32 %v497, %v514
        %v523 = vsub.f32 %v502, %v517
        %v524 = vsub.f32 %v505, %v520
        %v525 = vmul.f32 %v521, 1.442695
        %v526 = vpow.pop %v525
        %v527 = vmul.f32 %v522, 1.442695
        %v528 = vpow.pop %v527
        %v529 = vmul.f32 %v523, 1.442695
        %v530 = vpow.pop %v529
        %v531 = vmul.f32 %v524, 1.442695
        %v532 = vpow.pop %v531
        %v533 = vsel %vm508, %v526, 0.0
        %534 = vadd.xlane.f32.xlu0 %v533
        %v535 = vpop.xlane.xlu0 %534
        %v536 = vsel %vm508, %v528, 0.0
        %537 = vadd.xlane.f32.xlu0 %v536
        %v538 = vpop.xlane.xlu0 %537
        %v539 = vsel %vm508, %v530, 0.0
        %540 = vadd.xlane.f32.xlu0 %v539
        %v541 = vpop.xlane.xlu0 %540
        %v542 = vsel %vm508, %v532, 0.0
        %543 = vadd.xlane.f32.xlu0 %v542
        %v544 = vpop.xlane.xlu0 %543
        %v545 = vrcp.pop %v535
        %v546 = vrcp.pop %v538
        %v547 = vrcp.pop %v541
        %v548 = vrcp.pop %v544
        %v549 = vmul.f32 %v545, 0.1118034
        %v550 = vmul.f32 %v546, 0.1118034
        %v551 = vmul.f32 %v547, 0.1118034
        %v552 = vmul.f32 %v548, 0.1118034
        %v553 = vmul.f32 %v526, %v549
        %v554 = vmul.f32 %v528, %v550
        %v555 = vmul.f32 %v530, %v551
        %v556 = vmul.f32 %v532, %v552
        %v557 = vpack.c.bf16 %v554, %v553
        %v558 = vpack.c.bf16 %v556, %v555
        %559 = vrot.lane.b32.xlu0 %v435, 96
        %v560 = vpop.permute.xlu0 %559
        %v562 = vsel %vm508, %v557, 0
        %v565 = vsel %vm508, %v558, 0
        %vm567 = vcmask 1043456
        %v569 = vsel %vm567, %v560, 0
        %571 = vmatprep.subr.bf16.mxu0 0
        %572 = vmatpush1.bf16.msra.mxu0 %v569
        %573 = vmatprep.subr.bf16.mxu0 0
        %574 = vmatpush1.bf16.msra.mxu0 0
        %575 = vmatprep.subr.bf16.mxu0 0
        %576 = vmatpush1.bf16.msra.mxu0 0
        %577 = vmatprep.subr.bf16.mxu0 0
        %578 = vmatpush1.bf16.msra.mxu0 0
        %579 = vmatprep.subr.bf16.mxu0 0
        %580 = vmatpush1.bf16.msra.mxu0 0
        %581 = vmatprep.subr.bf16.mxu0 0
        %582 = vmatpush1.bf16.msra.mxu0 0
        %583 = vmatprep.subr.bf16.mxu0 0
        %584 = vmatpush1.bf16.msra.mxu0 0
        %585 = vmatprep.subr.bf16.mxu0 0
        %586 = vmatpush1.bf16.msra.mxu0 0
        %587 = vmatprep.subr.bf16.mxu0 0
        %588 = vmatpush1.bf16.msra.mxu0 0
        %589 = vmatprep.subr.bf16.mxu0 0
        %590 = vmatpush1.bf16.msra.mxu0 0
        %591 = vmatprep.subr.bf16.mxu0 0
        %592 = vmatpush1.bf16.msra.mxu0 0
        %593 = vmatprep.subr.bf16.mxu0 0
        %594 = vmatpush1.bf16.msra.mxu0 0
        %595 = vmatprep.subr.bf16.mxu0 0
        %596 = vmatpush1.bf16.msra.mxu0 0
        %597 = vmatprep.subr.bf16.mxu0 0
        %598 = vmatpush1.bf16.msra.mxu0 0
        %599 = vmatprep.subr.bf16.mxu0 0
        %600 = vmatpush1.bf16.msra.mxu0 0
        %601 = vmatprep.subr.bf16.mxu0 0
        %602 = vmatpush1.bf16.msra.mxu0 0
        %603 = vmatprep.mubr.bf16.mxu0 0
        %604 = vmatmul.mubr.bf16.gmra.mrb[0].mxu0 %v562
        %v605 = vpop.f32.mrb[0].mxu0
        %v606 = vadd.f32 0.0, %v605
        %v607 = vpop.f32.mrb[0].mxu0
        %v608 = vpop.f32.mrb[0].mxu0
        %v609 = vadd.f32 0.0, %v608
        %v610 = vpop.f32.mrb[0].mxu0
        %611 = vmatprep.mubr.bf16.mxu0 0
        %612 = vmatmul.mubr.bf16.gmra.mrb[0].mxu0 %v565
        %v613 = vpop.f32.mrb[0].mxu0
        %v614 = vadd.f32 0.0, %v613
        %v615 = vpop.f32.mrb[0].mxu0
        %v616 = vpop.f32.mrb[0].mxu0
        %v617 = vadd.f32 0.0, %v616
        %v618 = vpop.f32.mrb[0].mxu0
        %619 = vdwg.mxu0
        %v620 = vmul.f32 %v606, %v430
        %v621 = vmul.f32 %v609, %v431
        %v622 = vmul.f32 %v614, %v432
        %v623 = vmul.f32 %v617, %v433
        %v624 = vadd.f32 %v620, %v621
        %v625 = vadd.f32 %v624, %v622
        %v626 = vadd.f32 %v625, %v623
        %627 = vst.msk [vmem:[#allocation2] sm:$0xff] %vm385, %v626
        %v628 = vld [vmem:[#allocation2] sm:$0xff]
        %v629 = vpack.c.bf16 %v628, %v628
        %v630 = vld [vmem:[#allocation8] sm:$0xf]
        %v631 = vld [vmem:[#allocation8 + $0x4] sm:$0xf]
        %v632 = vld [vmem:[#allocation8 + $0x8] sm:$0xf]
        %v633 = vld [vmem:[#allocation8 + $0xc] sm:$0xf]
        %v634 = vld [vmem:[#allocation8 + $0x10] sm:$0xf]
        %v635 = vld [vmem:[#allocation8 + $0x14] sm:$0xf]
        %v636 = vld [vmem:[#allocation8 + $0x18] sm:$0xf]
        %v637 = vld [vmem:[#allocation8 + $0x1c] sm:$0xf]
        %v638 = vld [vmem:[#allocation8 + $0x20] sm:$0xf]
        %v639 = vld [vmem:[#allocation8 + $0x24] sm:$0xf]
        %v640 = vld [vmem:[%s4] sm:$0x1]
        %v642 = vlaneseq
        %v643 = vshrl.u32 %v642, 7
        %v644 = vsub.s32 0, %v643
        %v645 = vrot.slane %v640, %v644
        %v657 = vunpack.c.l.b16 %v630
        %v658 = vunpack.c.l.b16 %v631
        %v659 = vunpack.c.l.b16 %v632
        %v660 = vunpack.c.l.b16 %v633
        %v661 = vunpack.c.l.b16 %v634
        %v662 = vunpack.c.l.b16 %v635
        %v663 = vunpack.c.l.b16 %v636
        %v664 = vunpack.c.l.b16 %v637
        %v665 = vunpack.c.l.b16 %v638
        %v666 = vunpack.c.l.b16 %v639
        %v667 = vpack.c.b16 %v658, %v657
        %v668 = vpack.c.b16 %v660, %v659
        %v669 = vpack.c.b16 %v662, %v661
        %v670 = vpack.c.b16 %v664, %v663
        %v671 = vpack.c.b16 %v666, %v665
        %v678 = vsel %vm385, %v629, 0
        %680 = vmatprep.subr.bf16.mxu0 0
        %681 = vmatpush1.bf16.msra.mxu0 %v667
        %682 = vmatprep.subr.bf16.mxu0 0
        %683 = vmatpush1.bf16.msra.mxu0 %v668
        %684 = vmatprep.subr.bf16.mxu0 0
        %685 = vmatpush1.bf16.msra.mxu0 %v669
        %686 = vmatprep.subr.bf16.mxu0 0
        %687 = vmatpush1.bf16.msra.mxu0 %v670
        %688 = vmatprep.subr.bf16.mxu0 0
        %689 = vmatpush1.bf16.msra.mxu0 %v671
        %690 = vmatprep.subr.bf16.mxu0 0
        %691 = vmatpush1.bf16.msra.mxu0 0
        %692 = vmatprep.subr.bf16.mxu0 0
        %693 = vmatpush1.bf16.msra.mxu0 0
        %694 = vmatprep.subr.bf16.mxu0 0
        %695 = vmatpush1.bf16.msra.mxu0 0
        %696 = vmatprep.subr.bf16.mxu0 0
        %697 = vmatpush1.bf16.msra.mxu0 0
        %698 = vmatprep.subr.bf16.mxu0 0
        %699 = vmatpush1.bf16.msra.mxu0 0
        %700 = vmatprep.subr.bf16.mxu0 0
        %701 = vmatpush1.bf16.msra.mxu0 0
        %702 = vmatprep.subr.bf16.mxu0 0
        %703 = vmatpush1.bf16.msra.mxu0 0
        %704 = vmatprep.subr.bf16.mxu0 0
        %705 = vmatpush1.bf16.msra.mxu0 0
        %706 = vmatprep.subr.bf16.mxu0 0
        %707 = vmatpush1.bf16.msra.mxu0 0
        %708 = vmatprep.subr.bf16.mxu0 0
        %709 = vmatpush1.bf16.msra.mxu0 0
        %710 = vmatprep.subr.bf16.mxu0 0
        %711 = vmatpush1.bf16.msra.mxu0 0
        %712 = vmatprep.mubr.bf16.mxu0 0
        %713 = vmatmul.mubr.bf16.gmra.mrb[0].mxu0 %v678
        %v714 = vpop.f32.mrb[0].mxu0
        %v715 = vadd.f32 %v645, %v714
        %v716 = vpop.f32.mrb[0].mxu0
        %v717 = vpop.f32.mrb[0].mxu0
        %v718 = vpop.f32.mrb[0].mxu0
        %719 = vdwg.mxu0
        %720 = vst [vmem:[%s310] sm:$0xff] %v715
        %s721 = sand.u32 %s164, 1
        %s722 = scalar_lea.sflag [#allocation5], %s721
        %s723 = sand.u32 %s164, 1
        %s724 = smul.addr %s723, 8
        %s725 = scalar_lea.vmem [#allocation11], %s724
        // Predicated region
        $region61: #{tpu_custom_call.1} parent=43 // pred_check
          %p726 = pneg %p174
        $region62: #{tpu_custom_call.1} parent=43 // pred_check_branch
          %728 = sbr.rel (%p726) target = $region64
        $region63: #{tpu_custom_call.1} parent=43 // pred_region
          %s730 = ssub.s32 128, 128
          %731 = vsyncadd %s722, %s730
          %s732 = smul.addr %s25, 128
          %s733 = scalar_lea.hbm %s6, %s732
          %s735 = sshll.u32 %s725, 4
          %s736 = int_to_ptr.vmem [resolvable:$true] %s735
          %738 = dma.vmem_to_hbm [thread:$0]  %s736, 128, %s733, %s722
        $region64: #{tpu_custom_call.1} parent=43 // pred_fallthru
          _
      $region44: #{tpu_custom_call.1} parent=5 // pred_fallthru
        _
      %p739 = scmp.le.s32.totalorder 2, %s20
      // Predicated region
      $region65: #{tpu_custom_call.1} parent=5 // pred_check
        %p740 = pneg %p739
      $region66: #{tpu_custom_call.1} parent=5 // pred_check_branch
        %742 = sbr.rel (%p740) target = $region68
      $region67: #{tpu_custom_call.1} parent=5 // pred_region
        %s743 = ssub.s32 %s20, 2
        // Predicated region
        $region69: #{tpu_custom_call.1} parent=67 // pred_check
          %p744 = pneg %p180
        $region70: #{tpu_custom_call.1} parent=67 // pred_check_branch
          %746 = sbr.rel (%p744) target = $region72
        $region71: #{tpu_custom_call.1} parent=67 // pred_region
          %s747 = sand.u32 %s165, 1
          %s748 = scalar_lea.sflag [#allocation5], %s747
          %s749 = sand.u32 %s165, 1
          %s750 = smul.addr %s749, 8
          %s751 = scalar_lea.vmem [#allocation11], %s750
          %752 = dma.done %s748, 128
        $region72: #{tpu_custom_call.1} parent=67 // pred_fallthru
          _
      $region68: #{tpu_custom_call.1} parent=5 // pred_fallthru
        _
    $region6: #{tpu_custom_call.1} parent=1 // loop_footer
      %s24 = sadd.s32 1, %s20
    $region7: #{tpu_custom_call.1} parent=1 // loop_footer_branch
      %19 = sbr.rel target = $region3
    $region8: #{tpu_custom_call.1} parent=1 // loop_exit
      _
    %753 = vsyncpa [#allocation4], 1
    %s754 = scalar_lea.sflag [#allocation4], 1
    %755 = vsyncpa %s754, 1
    %756 = vsyncpa [#allocation7], 1
    %757 = vsyncpa [#allocation10], 1
    %758 = vsyncpa [#allocation5], 1
    %s759 = scalar_lea.sflag [#allocation5], 1
    %760 = vsyncpa %s759, 1

</llo_original>
